<compile_context>
chip_gen: v5e
topology: v5e:2x2
jax: 0.10.0
libtpu: 0.0.40
codegen_flags: <defaults>
</compile_context>

<pallas_src>
import jax
import jax.numpy as jnp
from jax.experimental import pallas as pl
from jax.experimental.pallas import tpu as pltpu

IN_FEATURES = 784
OUT_FEATURES = 10

DEFAULT_TILE_B = 4096     # f32 x: 2 bufs x 4096 x 896(lane-padded) x 4B ~= 29 MiB
MIN_TILE_B = 16           # bf16 packs 16 rows / vreg -> keep tiles 16-aligned
MAX_TILE_B = 4096         # v7x VMEM budget ceiling with f32 x


def _round_up(x, m):
    return -(-x // m) * m


def _linear_kernel(x_ref, w_ref, b_ref, o_ref):
    # x_ref: (TILE_B, 784) f32   w_ref: (784, 10) bf16
    # b_ref: (1, 10) f32         o_ref: (TILE_B, 10) f32
    # Cast to bf16 in-kernel (VMEM-local) so HBM only ever sees f32 x once.
    x = x_ref[...].astype(jnp.bfloat16)
    acc = jnp.dot(x, w_ref[...], preferred_element_type=jnp.float32)
    o_ref[...] = (acc + b_ref[...]).astype(o_ref.dtype)


def _linear_logsoftmax_kernel(x_ref, w_ref, b_ref, o_ref):
    # Fused epilogue: logits stay in VMEM, only log-probs are written out.
    x = x_ref[...].astype(jnp.bfloat16)
    logits = jnp.dot(x, w_ref[...],
                     preferred_element_type=jnp.float32) + b_ref[...]
    m = jnp.max(logits, axis=-1, keepdims=True)
    shifted = logits - m
    lse = jnp.log(jnp.sum(jnp.exp(shifted), axis=-1, keepdims=True))
    o_ref[...] = (shifted - lse).astype(o_ref.dtype)


def _pick_tile_b(B, tile_b):
    """Pick the batch tile: big tiles for low step overhead, but >= 2 grid
    steps when B allows so v7x's second TensorCore gets work."""
    tile_b = min(tile_b, MAX_TILE_B)
    if B < 2 * MIN_TILE_B:
        # Too small to split usefully: single step, block == full array dims
        # so the (8, 128) layout rule is trivially satisfied.
        return B
    half = _round_up(pl.cdiv(B, 2), MIN_TILE_B)   # 2 steps cover B
    tb = min(tile_b, half)
    tb = max(MIN_TILE_B, (tb // MIN_TILE_B) * MIN_TILE_B)
    return tb


def _forward(kernel, x, w_t, b, *, tile_b=DEFAULT_TILE_B, transcendentals=0):
    B, K = x.shape
    assert K == IN_FEATURES
    assert w_t.shape == (IN_FEATURES, OUT_FEATURES)

    # x stays f32 (cast happens in-kernel); weight is tiny (784x10) and is
    # cast once here so the resident VMEM block is already bf16.
    x_c = x.astype(jnp.float32)
    w_c = w_t.astype(jnp.bfloat16)
    b2d = b.reshape(1, OUT_FEATURES).astype(jnp.float32)

    tile_b = _pick_tile_b(B, tile_b)
    grid = (pl.cdiv(B, tile_b),)

    # VMEM budget: 2 double-buffered x blocks + 2 padded out blocks + weight
    # + bias + headroom.  Covers v5e's 16 MiB scoped default; capped so it
    # never asks for more than v7x's 64 MiB physical VMEM.
    lane_in = _round_up(IN_FEATURES, 128)     # 896
    lane_out = _round_up(OUT_FEATURES, 128)   # 128
    vmem_limit = (2 * tile_b * lane_in * 4          # x blocks (f32)
                  + 2 * tile_b * lane_out * 4       # out blocks (f32)
                  + 2 * IN_FEATURES * lane_out * 2  # weight (bf16)
                  + 2 * 8 * lane_out * 4            # bias
                  + (2 << 20))                      # headroom
    vmem_limit = min(vmem_limit, 56 << 20)

    cost = pl.CostEstimate(
        flops=2 * B * IN_FEATURES * OUT_FEATURES,
        transcendentals=transcendentals,
        bytes_accessed=(B * IN_FEATURES * 4          # f32 x stream
                        + IN_FEATURES * OUT_FEATURES * 2
                        + OUT_FEATURES * 4
                        + B * OUT_FEATURES * 4),
    )

    return pl.pallas_call(
        kernel,
        out_shape=jax.ShapeDtypeStruct((B, OUT_FEATURES), jnp.float32),
        grid_spec=pltpu.PrefetchScalarGridSpec(
            num_scalar_prefetch=0,
            grid=grid,
            in_specs=[
                # x streams per batch tile; weight/bias index_maps are
                # grid-invariant so their blocks stay VMEM-resident.
                pl.BlockSpec((tile_b, IN_FEATURES), lambda i: (i, 0)),
                pl.BlockSpec((IN_FEATURES, OUT_FEATURES), lambda i: (0, 0)),
                pl.BlockSpec((1, OUT_FEATURES), lambda i: (0, 0)),
            ],
            out_specs=pl.BlockSpec((tile_b, OUT_FEATURES), lambda i: (i, 0)),
        ),
        compiler_params=pltpu.CompilerParams(
            # Batch tiles are independent -> megacore-shardable on v7x.
            dimension_semantics=("parallel",),
            vmem_limit_bytes=int(vmem_limit),
        ),
        cost_estimate=cost,
    )(x_c, w_c, b2d)


def mnist_logistic_forward(x, w_t, b, **kw):
    """y = x @ w_t + b  (same semantics as nn.Linear(784, 10)(x))."""
    return _forward(_linear_kernel, x, w_t, b, **kw)


def mnist_logistic_log_probs(x, w_t, b, **kw):
    """Fused linear + log_softmax head (logits never hit HBM)."""
    return _forward(_linear_logsoftmax_kernel, x, w_t, b,
                    transcendentals=x.shape[0] * OUT_FEATURES, **kw)


def init_params(key):
    """Deterministic init matching nn.Linear's default U(-1/sqrt(fan_in), +)."""
    kw_, kb = jax.random.split(key)
    bound = 1.0 / (IN_FEATURES ** 0.5)
    # PyTorch stores weight as (out, in); we keep the transposed (in, out) copy.
    w = jax.random.uniform(
        kw_, (OUT_FEATURES, IN_FEATURES), jnp.float32, -bound, bound
    )
    b = jax.random.uniform(kb, (OUT_FEATURES,), jnp.float32, -bound, bound)
    return w.T, b  # (784, 10), (10,)


if __name__ == "__main__":
    key = jax.random.PRNGKey(0)
    k_x, k_p = jax.random.split(key)

    bs = 64  # same batch size as the walkthrough script
    xb = jax.random.uniform(k_x, (bs, IN_FEATURES), jnp.float32)  # MNIST-like
    w_t, b = init_params(k_p)

    logits = jax.block_until_ready(mnist_logistic_forward(xb, w_t, b))
    log_probs = jax.block_until_ready(mnist_logistic_log_probs(xb, w_t, b))

    assert logits.shape == (bs, OUT_FEATURES)
    assert log_probs.shape == (bs, OUT_FEATURES)

    # Reference with matching bf16 operands + f32 accumulation.
    ref = jnp.dot(xb.astype(jnp.bfloat16), w_t.astype(jnp.bfloat16),
                  preferred_element_type=jnp.float32) + b
    assert jnp.allclose(logits, ref, atol=1e-4, rtol=1e-4)
    # bf16 MXU operands stay close to the pure-f32 math of the PyTorch module.
    assert jnp.allclose(logits, xb @ w_t + b, atol=5e-2, rtol=5e-2)
    # Fused epilogue matches jax.nn.log_softmax on the same logits.
    assert jnp.allclose(log_probs, jax.nn.log_softmax(ref, axis=-1),
                        atol=1e-3, rtol=1e-3)

    print("KERNEL_OK")
</pallas_src>

<mosaic_0001>
module attributes {stable_mosaic.version = 11 : i64} {
  func.func @_linear_kernel(%arg0: i32, %arg1: memref<32x784xf32, #tpu.memory_space<vmem>>, %arg2: memref<784x10xbf16, #tpu.memory_space<vmem>>, %arg3: memref<1x10xf32, #tpu.memory_space<vmem>>, %arg4: memref<32x10xf32, #tpu.memory_space<vmem>>) attributes {dimension_semantics = [#tpu.dimension_semantics<parallel>], iteration_bounds = array<i64: 2>, scalar_prefetch = 0 : i64, scratch_operands = 0 : i64, tpu.core_type = #tpu.core_type<tc>, window_params = [{transform_indices = @transform_0, window_bounds = array<i64: 32, 784>}, {pipeline_mode = #tpu.pipeline_mode<synchronous>, transform_indices = @transform_1, window_bounds = array<i64: 784, 10>}, {pipeline_mode = #tpu.pipeline_mode<synchronous>, transform_indices = @transform_2, window_bounds = array<i64: 1, 10>}, {transform_indices = @transform_3, window_bounds = array<i64: 32, 10>}]} {
    %c0 = arith.constant 0 : index
    %c0_0 = arith.constant 0 : index
    %0 = vector.load %arg1[%c0, %c0_0] : memref<32x784xf32, #tpu.memory_space<vmem>>, vector<32x784xf32>
    %1 = arith.truncf %0 : vector<32x784xf32> to vector<32x784xbf16>
    %c0_1 = arith.constant 0 : index
    %c0_2 = arith.constant 0 : index
    %2 = vector.load %arg2[%c0_1, %c0_2] : memref<784x10xbf16, #tpu.memory_space<vmem>>, vector<784x10xbf16>
    %cst = arith.constant dense<0.000000e+00> : vector<32x10xf32>
    %3 = tpu.matmul %1, %2, %cst {dimension_numbers = #tpu.dot_dimension_numbers<[1], [0], [0], [1], [0, 0, 1, 1], [], []>} : vector<32x784xbf16>, vector<784x10xbf16>, vector<32x10xf32> -> vector<32x10xf32>
    %c0_3 = arith.constant 0 : index
    %c0_4 = arith.constant 0 : index
    %4 = vector.load %arg3[%c0_3, %c0_4] : memref<1x10xf32, #tpu.memory_space<vmem>>, vector<1x10xf32>
    %5 = vector.broadcast %4 : vector<1x10xf32> to vector<32x10xf32>
    %6 = arith.addf %3, %5 : vector<32x10xf32>
    %c0_5 = arith.constant 0 : index
    %c0_6 = arith.constant 0 : index
    %7 = vector.load %arg4[%c0_5, %c0_6] : memref<32x10xf32, #tpu.memory_space<vmem>>, vector<32x10xf32>
    tpu.vector_store %arg4[%c0_5, %c0_6], %6 {strides = array<i32>} : memref<32x10xf32, #tpu.memory_space<vmem>>, vector<32x10xf32>,
    return
  }
  func.func @transform_0(%arg0: i32) -> (i32, i32) {
    %c0_i32 = arith.constant 0 : i32
    %c0_i32_0 = arith.constant 0 : i32
    return %arg0, %c0_i32 : i32, i32
  }
  func.func @transform_1(%arg0: i32) -> (i32, i32) {
    %c0_i32 = arith.constant 0 : i32
    %c0_i32_0 = arith.constant 0 : i32
    %c0_i32_1 = arith.constant 0 : i32
    return %c0_i32, %c0_i32_0 : i32, i32
  }
  func.func @transform_2(%arg0: i32) -> (i32, i32) {
    %c0_i32 = arith.constant 0 : i32
    %c0_i32_0 = arith.constant 0 : i32
    %c0_i32_1 = arith.constant 0 : i32
    return %c0_i32, %c0_i32_0 : i32, i32
  }
  func.func @transform_3(%arg0: i32) -> (i32, i32) {
    %c0_i32 = arith.constant 0 : i32
    %c0_i32_0 = arith.constant 0 : i32
    return %arg0, %c0_i32 : i32, i32
  }
}

</mosaic_0001>

<llo_original>
// kernel: tpu_custom_call.1
$region0: #{tpu_custom_call.1}
  #allocation0 [shape = 'u32[]', space=smem, size = 0x4, offset = 0x4, fixed_abs, tag = 'smem constant byte address 0x4 - core index']
  #allocation1 [shape = 'u32[72,128]{1,0:T(1,128)}', space=vmem, size = 0x9000, scoped, tag = 'internal scratch']
  %s0 = inlined_call_operand.vmem [shape: f32[64,784], index: 0, kind: input, shape index: {}]
  %s1 = inlined_call_operand.vmem [shape: bf16[784,10], index: 1, kind: input, shape index: {}]
  %s2 = inlined_call_operand.hbm [shape: f32[1,10], index: 2, kind: input, shape index: {}]
  %s3 = inlined_call_operand.vmem [shape: f32[64,10], index: 3, kind: output, shape index: {}]
  %s4 = sld [smem:[#allocation0]]
  $region49: #{tpu_custom_call.1} parent=0
    _
  %s6 = ssub.s32 1, %s4
  %s7 = scalar_select 0, %s6, %s4
  $region1: #{tpu_custom_call.1} parent=0
    #allocation2 [shape = 'u8[512]{0}', space=vmem, size = 0x400, scoped, tag = 'input window, operand 2, single buffered']
    #allocation3 [shape = 's32[2]{0}', space=sflag, size = 0x8, scoped, tag = 'scoped memory for tpu_custom_call.1']
    %8 = vsyncpa [#allocation3], 0
    loop: start=0, step=1, limit=4
    $region2: #{tpu_custom_call.1} parent=1 // loop_pre_header
      _
    $region3: #{tpu_custom_call.1} parent=1 // loop_header
      %s10 = sphi 0, %s14
      %p11 = scmp.ge.s32.totalorder %s10, 4
      %s20 = sphi 0, %s22
      %s23 = sphi 0, %s20
      %s24 = sphi 0, %s23
      %s40 = sphi 0, %s24
      %s44 = sphi 0, %s44
      %s46 = sphi 0, %s44
      %s47 = sphi 0, %s46
      %s61 = sphi 0, %s47
      %s65 = sphi 0, %s65
      %s67 = sphi 0, %s65
      %s68 = sphi 0, %s67
      %s82 = sphi 0, %s68
      %s88 = sphi 0, %s90
      %s91 = sphi 0, %s88
      %s92 = sphi 0, %s91
      %s108 = sphi 0, %s92
    $region4: #{tpu_custom_call.1} parent=1 // loop_header_branch
      %13 = sbr.rel (%p11) target = $region8
    $region5: #{tpu_custom_call.1} parent=1 // loop_body
      %s15 = ssub.s32 %s10, 1
      %s16 = ssub.s32 %s10, 2
      %s17 = sadd.s32 %s10, 1
      %s18 = ssub.s32 %s10, %s17
      %p19 = scmp.eq.s32.totalorder %s18, 0
      %s21 = sadd.s32 %s20, 1
      %s22 = scalar_select %p19, %s20, %s21
      %p25 = pneg %p19
      %p26 = scmp.eq.s32.totalorder %s10, 1
      %p27 = por %p25, %p26
      %p28 = scmp.ne.s32.totalorder %s20, %s23
      %p29 = scmp.eq.s32.totalorder %s10, 0
      %p30 = por %p28, %p29
      %p31 = scmp.ne.s32.totalorder %s20, %s23
      %p32 = scmp.eq.s32.totalorder %s15, 1
      %p33 = por %p31, %p32
      %p34 = scmp.ne.s32.totalorder %s23, %s24
      %p35 = scmp.eq.s32.totalorder %s15, 0
      %p36 = por %p34, %p35
      %p37 = scmp.ne.s32.totalorder %s23, %s24
      %p38 = scmp.eq.s32.totalorder %s16, 1
      %p39 = por %p37, %p38
      %p41 = scmp.ne.s32.totalorder %s24, %s40
      %p42 = scmp.eq.s32.totalorder %s16, 0
      %p43 = por %p41, %p42
      %s45 = sadd.s32 %s44, 1
      %p48 = scmp.eq.s32.totalorder %s10, 1
      %p49 = scmp.ne.s32.totalorder %s44, %s46
      %p50 = scmp.eq.s32.totalorder %s10, 0
      %p51 = por %p49, %p50
      %p52 = scmp.ne.s32.totalorder %s44, %s46
      %p53 = scmp.eq.s32.totalorder %s15, 1
      %p54 = por %p52, %p53
      %p55 = scmp.ne.s32.totalorder %s46, %s47
      %p56 = scmp.eq.s32.totalorder %s15, 0
      %p57 = por %p55, %p56
      %p58 = scmp.ne.s32.totalorder %s46, %s47
      %p59 = scmp.eq.s32.totalorder %s16, 1
      %p60 = por %p58, %p59
      %p62 = scmp.ne.s32.totalorder %s47, %s61
      %p63 = scmp.eq.s32.totalorder %s16, 0
      %p64 = por %p62, %p63
      %s66 = sadd.s32 %s65, 1
      %p69 = scmp.eq.s32.totalorder %s10, 1
      %p70 = scmp.ne.s32.totalorder %s65, %s67
      %p71 = scmp.eq.s32.totalorder %s10, 0
      %p72 = por %p70, %p71
      %p73 = scmp.ne.s32.totalorder %s65, %s67
      %p74 = scmp.eq.s32.totalorder %s15, 1
      %p75 = por %p73, %p74
      %p76 = scmp.ne.s32.totalorder %s67, %s68
      %p77 = scmp.eq.s32.totalorder %s15, 0
      %p78 = por %p76, %p77
      %p79 = scmp.ne.s32.totalorder %s67, %s68
      %p80 = scmp.eq.s32.totalorder %s16, 1
      %p81 = por %p79, %p80
      %p83 = scmp.ne.s32.totalorder %s68, %s82
      %p84 = scmp.eq.s32.totalorder %s16, 0
      %p85 = por %p83, %p84
      %s86 = ssub.s32 %s10, %s17
      %p87 = scmp.eq.s32.totalorder %s86, 0
      %s89 = sadd.s32 %s88, 1
      %s90 = scalar_select %p87, %s88, %s89
      %p93 = pneg %p87
      %p94 = scmp.eq.s32.totalorder %s10, 1
      %p95 = por %p93, %p94
      %p96 = scmp.ne.s32.totalorder %s88, %s91
      %p97 = scmp.eq.s32.totalorder %s10, 0
      %p98 = por %p96, %p97
      %p99 = scmp.ne.s32.totalorder %s88, %s91
      %p100 = scmp.eq.s32.totalorder %s15, 1
      %p101 = por %p99, %p100
      %p102 = scmp.ne.s32.totalorder %s91, %s92
      %p103 = scmp.eq.s32.totalorder %s15, 0
      %p104 = por %p102, %p103
      %p105 = scmp.ne.s32.totalorder %s91, %s92
      %p106 = scmp.eq.s32.totalorder %s16, 1
      %p107 = por %p105, %p106
      %p109 = scmp.ne.s32.totalorder %s92, %s108
      %p110 = scmp.eq.s32.totalorder %s16, 0
      %p111 = por %p109, %p110
      %p112 = scmp.le.s32.totalorder 1, %s10
      %p113 = scmp.lt.s32.totalorder %s10, 3
      %p114 = pnand %p112, %p113
      %p115 = pneg %p114
      // Predicated region
      $region9: #{tpu_custom_call.1} parent=5 // pred_check
        _
      $region10: #{tpu_custom_call.1} parent=5 // pred_check_branch
        %117 = sbr.rel (%p114) target = $region12
      $region11: #{tpu_custom_call.1} parent=5 // pred_region
        %s118 = ssub.s32 %s10, 1
        // Predicated region
        $region13: #{tpu_custom_call.1} parent=11 // pred_check
          %p119 = pneg %p57
        $region14: #{tpu_custom_call.1} parent=11 // pred_check_branch
          %121 = sbr.rel (%p119) target = $region16
        $region15: #{tpu_custom_call.1} parent=11 // pred_region
          _
        $region16: #{tpu_custom_call.1} parent=11 // pred_fallthru
          _
        // Predicated region
        $region17: #{tpu_custom_call.1} parent=11 // pred_check
          %p122 = pneg %p78
        $region18: #{tpu_custom_call.1} parent=11 // pred_check_branch
          %124 = sbr.rel (%p122) target = $region20
        $region19: #{tpu_custom_call.1} parent=11 // pred_region
          %126 = vsyncadd [#allocation3], 0
          %s128 = sshll.u32 %s2, 4
          %s129 = int_to_ptr.hbm [resolvable:$true] %s128
          %s130 = sshll.u32 [#allocation2], 4
          %s131 = int_to_ptr.vmem [resolvable:$true] %s130
          %133 = dma.hbm_to_vmem [thread:$0]  %s129, 16, %s131, [#allocation3]
        $region20: #{tpu_custom_call.1} parent=11 // pred_fallthru
          _
      $region12: #{tpu_custom_call.1} parent=5 // pred_fallthru
        _
      %p134 = scmp.lt.s32.totalorder %s10, 2
      // Predicated region
      $region21: #{tpu_custom_call.1} parent=5 // pred_check
        %p135 = pneg %p134
      $region22: #{tpu_custom_call.1} parent=5 // pred_check_branch
        %137 = sbr.rel (%p135) target = $region24
      $region23: #{tpu_custom_call.1} parent=5 // pred_region
        // Predicated region
        $region25: #{tpu_custom_call.1} parent=23 // pred_check
          %p138 = pneg %p30
        $region26: #{tpu_custom_call.1} parent=23 // pred_check_branch
          %140 = sbr.rel (%p138) target = $region28
        $region27: #{tpu_custom_call.1} parent=23 // pred_region
          %s141 = smul.u32 4, %s10
          %p142 = scmp.lt.s32.totalorder %s141, 7
          %s143 = scalar_select %p142, %s141, 7
          %s144 = smul.addr %s143, 7
          %s145 = smul.addr %s144, 8
          %s146 = scalar_lea.vmem %s0, %s145
          %s147 = smul.u32 4, %s10
        $region28: #{tpu_custom_call.1} parent=23 // pred_fallthru
          _
      $region24: #{tpu_custom_call.1} parent=5 // pred_fallthru
        _
      %p148 = scmp.le.s32.totalorder 1, %s10
      %p149 = scmp.lt.s32.totalorder %s10, 3
      %p150 = pnand %p148, %p149
      %p151 = pneg %p150
      // Predicated region
      $region29: #{tpu_custom_call.1} parent=5 // pred_check
        _
      $region30: #{tpu_custom_call.1} parent=5 // pred_check_branch
        %153 = sbr.rel (%p150) target = $region32
      $region31: #{tpu_custom_call.1} parent=5 // pred_region
        %s154 = ssub.s32 %s10, 1
        // Predicated region
        $region33: #{tpu_custom_call.1} parent=31 // pred_check
          %p155 = pneg %p78
        $region34: #{tpu_custom_call.1} parent=31 // pred_check_branch
          %157 = sbr.rel (%p155) target = $region36
        $region35: #{tpu_custom_call.1} parent=31 // pred_region
          %159 = dma.done [#allocation3], 16
        $region36: #{tpu_custom_call.1} parent=31 // pred_fallthru
          _
        %s160 = smul.u32 4, %s15
        %p161 = scmp.lt.s32.totalorder %s160, 7
        %s162 = scalar_select %p161, %s160, 7
        %s163 = smul.addr %s162, 7
        %s164 = smul.addr %s163, 8
        %s165 = scalar_lea.vmem %s0, %s164
        %p166 = pneg %p36
        %p167 = pneg %p33
        %p168 = pneg %p57
        %p169 = pneg %p54
        %p170 = pneg %p78
        %p171 = pneg %p75
        %p172 = pneg %p104
        %p173 = pneg %p101
        %s174 = smul.u32 4, %s15
        %p175 = scmp.lt.s32.totalorder %s174, 7
        %s176 = scalar_select %p175, %s174, 7
        %s177 = smul.addr %s176, 8
        %s178 = scalar_lea.vmem %s3, %s177
        %s179 = smul.u32 4, %s15
        %p180 = scmp.lt.s32.totalorder %s179, 7
        %s181 = scalar_select %p180, %s179, 7
        %s182 = smul.addr %s181, 7
        %s183 = smul.addr %s182, 8
        %s184 = scalar_lea.vmem %s0, %s183
        %s185 = smul.u32 4, %s15
        %s186 = smul.u32 4, %s15
        %p187 = scmp.lt.s32.totalorder %s186, 7
        %s188 = scalar_select %p187, %s186, 7
        %s189 = smul.addr %s188, 8
        %s190 = scalar_lea.vmem %s3, %s189
        %s191 = smul.u32 4, %s15
        %v193 = vld [vmem:[%s184] sm:$0xff]
        %v194 = vld [vmem:[%s184 + $0x8] sm:$0xff]
        %v195 = vld [vmem:[%s184 + $0x10] sm:$0xff]
        %v196 = vld [vmem:[%s184 + $0x18] sm:$0xff]
        %v197 = vld [vmem:[%s184 + $0x20] sm:$0xff]
        %v198 = vld [vmem:[%s184 + $0x28] sm:$0xff]
        %v199 = vld [vmem:[%s184 + $0x30] sm:$0xff]
        %v200 = vld [vmem:[%s184 + $0x38] sm:$0xff]
        %v201 = vld [vmem:[%s184 + $0x40] sm:$0xff]
        %v202 = vld [vmem:[%s184 + $0x48] sm:$0xff]
        %v203 = vld [vmem:[%s184 + $0x50] sm:$0xff]
        %v204 = vld [vmem:[%s184 + $0x58] sm:$0xff]
        %v205 = vld [vmem:[%s184 + $0x60] sm:$0xff]
        %v206 = vld [vmem:[%s184 + $0x68] sm:$0xff]
        %v207 = vld [vmem:[%s184 + $0x70] sm:$0xff]
        %v208 = vld [vmem:[%s184 + $0x78] sm:$0xff]
        %v209 = vld [vmem:[%s184 + $0x80] sm:$0xff]
        %v210 = vld [vmem:[%s184 + $0x88] sm:$0xff]
        %v211 = vld [vmem:[%s184 + $0x90] sm:$0xff]
        %v212 = vld [vmem:[%s184 + $0x98] sm:$0xff]
        %v213 = vld [vmem:[%s184 + $0xa0] sm:$0xff]
        %v214 = vld [vmem:[%s184 + $0xa8] sm:$0xff]
        %v215 = vld [vmem:[%s184 + $0xb0] sm:$0xff]
        %v216 = vld [vmem:[%s184 + $0xb8] sm:$0xff]
        %v217 = vld [vmem:[%s184 + $0xc0] sm:$0xff]
        %v218 = vld [vmem:[%s184 + $0xc8] sm:$0xff]
        %v219 = vld [vmem:[%s184 + $0xd0] sm:$0xff]
        %v220 = vld [vmem:[%s184 + $0xd8] sm:$0xff]
        %v221 = vpack.c.bf16 %v200, %v193
        %v222 = vpack.c.bf16 %v201, %v194
        %v223 = vpack.c.bf16 %v202, %v195
        %v224 = vpack.c.bf16 %v203, %v196
        %v225 = vpack.c.bf16 %v204, %v197
        %v226 = vpack.c.bf16 %v205, %v198
        %v227 = vpack.c.bf16 %v206, %v199
        %v228 = vpack.c.bf16 %v214, %v207
        %v229 = vpack.c.bf16 %v215, %v208
        %v230 = vpack.c.bf16 %v216, %v209
        %v231 = vpack.c.bf16 %v217, %v210
        %v232 = vpack.c.bf16 %v218, %v211
        %v233 = vpack.c.bf16 %v219, %v212
        %v234 = vpack.c.bf16 %v220, %v213
        %v235 = vld [vmem:[%s1] sm:$0xf]
        %v236 = vld [vmem:[%s1 + $0x4] sm:$0xf]
        %v237 = vld [vmem:[%s1 + $0x8] sm:$0xf]
        %v238 = vld [vmem:[%s1 + $0xc] sm:$0xf]
        %v239 = vld [vmem:[%s1 + $0x10] sm:$0xf]
        %v240 = vld [vmem:[%s1 + $0x14] sm:$0xf]
        %v241 = vld [vmem:[%s1 + $0x18] sm:$0xf]
        %v242 = vld [vmem:[%s1 + $0x1c] sm:$0xf]
        %v243 = vld [vmem:[%s1 + $0x20] sm:$0xf]
        %v244 = vld [vmem:[%s1 + $0x24] sm:$0xf]
        %v245 = vld [vmem:[%s1 + $0x28] sm:$0xf]
        %v246 = vld [vmem:[%s1 + $0x2c] sm:$0xf]
        %v247 = vld [vmem:[%s1 + $0x30] sm:$0xf]
        %v248 = vld [vmem:[%s1 + $0x34] sm:$0xf]
        %v249 = vld [vmem:[%s1 + $0x38] sm:$0xf]
        %v250 = vld [vmem:[%s1 + $0x3c] sm:$0xf]
        %v251 = vld [vmem:[%s1 + $0x40] sm:$0xf]
        %v252 = vld [vmem:[%s1 + $0x44] sm:$0xf]
        %v253 = vld [vmem:[%s1 + $0x48] sm:$0xf]
        %v254 = vld [vmem:[%s1 + $0x4c] sm:$0xf]
        %v255 = vld [vmem:[%s1 + $0x50] sm:$0xf]
        %v256 = vld [vmem:[%s1 + $0x54] sm:$0xf]
        %v257 = vld [vmem:[%s1 + $0x58] sm:$0xf]
        %v258 = vld [vmem:[%s1 + $0x5c] sm:$0xf]
        %v259 = vld [vmem:[%s1 + $0x60] sm:$0xf]
        %v260 = vld [vmem:[%s1 + $0x64] sm:$0xf]
        %v261 = vld [vmem:[%s1 + $0x68] sm:$0xf]
        %v262 = vld [vmem:[%s1 + $0x6c] sm:$0xf]
        %v263 = vld [vmem:[%s1 + $0x70] sm:$0xf]
        %v264 = vld [vmem:[%s1 + $0x74] sm:$0xf]
        %v265 = vld [vmem:[%s1 + $0x78] sm:$0xf]
        %v266 = vld [vmem:[%s1 + $0x7c] sm:$0xf]
        %v267 = vld [vmem:[%s1 + $0x80] sm:$0xf]
        %v268 = vld [vmem:[%s1 + $0x84] sm:$0xf]
        %v269 = vld [vmem:[%s1 + $0x88] sm:$0xf]
        %v270 = vld [vmem:[%s1 + $0x8c] sm:$0xf]
        %v271 = vld [vmem:[%s1 + $0x90] sm:$0xf]
        %v272 = vld [vmem:[%s1 + $0x94] sm:$0xf]
        %v273 = vld [vmem:[%s1 + $0x98] sm:$0xf]
        %v274 = vld [vmem:[%s1 + $0x9c] sm:$0xf]
        %v275 = vld [vmem:[%s1 + $0xa0] sm:$0xf]
        %v276 = vld [vmem:[%s1 + $0xa4] sm:$0xf]
        %v277 = vld [vmem:[%s1 + $0xa8] sm:$0xf]
        %v278 = vld [vmem:[%s1 + $0xac] sm:$0xf]
        %v279 = vld [vmem:[%s1 + $0xb0] sm:$0xf]
        %v280 = vld [vmem:[%s1 + $0xb4] sm:$0xf]
        %v281 = vld [vmem:[%s1 + $0xb8] sm:$0xf]
        %v282 = vld [vmem:[%s1 + $0xbc] sm:$0xf]
        %v283 = vld [vmem:[%s1 + $0xc0] sm:$0xf]
        %v284 = vld [vmem:[%s1 + $0xc4] sm:$0xf]
        %v285 = vld [vmem:[%s1 + $0xc8] sm:$0xf]
        %v286 = vld [vmem:[%s1 + $0xcc] sm:$0xf]
        %v287 = vld [vmem:[%s1 + $0xd0] sm:$0xf]
        %v288 = vld [vmem:[%s1 + $0xd4] sm:$0xf]
        %v289 = vld [vmem:[%s1 + $0xd8] sm:$0xf]
        %v290 = vld [vmem:[%s1 + $0xdc] sm:$0xf]
        %v291 = vld [vmem:[%s1 + $0xe0] sm:$0xf]
        %v292 = vld [vmem:[%s1 + $0xe4] sm:$0xf]
        %v293 = vld [vmem:[%s1 + $0xe8] sm:$0xf]
        %v294 = vld [vmem:[%s1 + $0xec] sm:$0xf]
        %v295 = vld [vmem:[%s1 + $0xf0] sm:$0xf]
        %v296 = vld [vmem:[%s1 + $0xf4] sm:$0xf]
        %v297 = vld [vmem:[%s1 + $0xf8] sm:$0xf]
        %v298 = vld [vmem:[%s1 + $0xfc] sm:$0xf]
        %v299 = vld [vmem:[%s1 + $0x100] sm:$0xf]
        %v300 = vld [vmem:[%s1 + $0x104] sm:$0xf]
        %v301 = vld [vmem:[%s1 + $0x108] sm:$0xf]
        %v302 = vld [vmem:[%s1 + $0x10c] sm:$0xf]
        %v303 = vld [vmem:[%s1 + $0x110] sm:$0xf]
        %v304 = vld [vmem:[%s1 + $0x114] sm:$0xf]
        %v305 = vld [vmem:[%s1 + $0x118] sm:$0xf]
        %v306 = vld [vmem:[%s1 + $0x11c] sm:$0xf]
        %v307 = vld [vmem:[%s1 + $0x120] sm:$0xf]
        %v308 = vld [vmem:[%s1 + $0x124] sm:$0xf]
        %v309 = vld [vmem:[%s1 + $0x128] sm:$0xf]
        %v310 = vld [vmem:[%s1 + $0x12c] sm:$0xf]
        %v311 = vld [vmem:[%s1 + $0x130] sm:$0xf]
        %v312 = vld [vmem:[%s1 + $0x134] sm:$0xf]
        %v313 = vld [vmem:[%s1 + $0x138] sm:$0xf]
        %v314 = vld [vmem:[%s1 + $0x13c] sm:$0xf]
        %v315 = vld [vmem:[%s1 + $0x140] sm:$0xf]
        %v316 = vld [vmem:[%s1 + $0x144] sm:$0xf]
        %v317 = vld [vmem:[%s1 + $0x148] sm:$0xf]
        %v318 = vld [vmem:[%s1 + $0x14c] sm:$0xf]
        %v319 = vld [vmem:[%s1 + $0x150] sm:$0xf]
        %v320 = vld [vmem:[%s1 + $0x154] sm:$0xf]
        %v321 = vld [vmem:[%s1 + $0x158] sm:$0xf]
        %v322 = vld [vmem:[%s1 + $0x15c] sm:$0xf]
        %v323 = vld [vmem:[%s1 + $0x160] sm:$0xf]
        %v324 = vld [vmem:[%s1 + $0x164] sm:$0xf]
        %v325 = vld [vmem:[%s1 + $0x168] sm:$0xf]
        %v326 = vld [vmem:[%s1 + $0x16c] sm:$0xf]
        %v327 = vld [vmem:[%s1 + $0x170] sm:$0xf]
        %v328 = vld [vmem:[%s1 + $0x174] sm:$0xf]
        %v329 = vld [vmem:[%s1 + $0x178] sm:$0xf]
        %v330 = vld [vmem:[%s1 + $0x17c] sm:$0xf]
        %v331 = vld [vmem:[%s1 + $0x180] sm:$0xf]
        %v332 = vld [vmem:[%s1 + $0x184] sm:$0xf]
        %v333 = vld [vmem:[#allocation2] sm:$0x1]
        %v335 = vperm.slane %v333, 0
        %v435 = vunpack.c.l.b16 %v235
        %v436 = vunpack.c.l.b16 %v236
        %v437 = vunpack.c.l.b16 %v237
        %v438 = vunpack.c.l.b16 %v238
        %v439 = vunpack.c.l.b16 %v239
        %v440 = vunpack.c.l.b16 %v240
        %v441 = vunpack.c.l.b16 %v241
        %v442 = vunpack.c.l.b16 %v242
        %v443 = vunpack.c.l.b16 %v243
        %v444 = vunpack.c.l.b16 %v244
        %v445 = vunpack.c.l.b16 %v245
        %v446 = vunpack.c.l.b16 %v246
        %v447 = vunpack.c.l.b16 %v247
        %v448 = vunpack.c.l.b16 %v248
        %v449 = vunpack.c.l.b16 %v249
        %v450 = vunpack.c.l.b16 %v250
        %v451 = vunpack.c.l.b16 %v251
        %v452 = vunpack.c.l.b16 %v252
        %v453 = vunpack.c.l.b16 %v253
        %v454 = vunpack.c.l.b16 %v254
        %v455 = vunpack.c.l.b16 %v255
        %v456 = vunpack.c.l.b16 %v256
        %v457 = vunpack.c.l.b16 %v257
        %v458 = vunpack.c.l.b16 %v258
        %v459 = vunpack.c.l.b16 %v259
        %v460 = vunpack.c.l.b16 %v260
        %v461 = vunpack.c.l.b16 %v261
        %v462 = vunpack.c.l.b16 %v262
        %v463 = vunpack.c.l.b16 %v263
        %v464 = vunpack.c.l.b16 %v264
        %v465 = vunpack.c.l.b16 %v265
        %v466 = vunpack.c.l.b16 %v266
        %v467 = vunpack.c.l.b16 %v267
        %v468 = vunpack.c.l.b16 %v268
        %v469 = vunpack.c.l.b16 %v269
        %v470 = vunpack.c.l.b16 %v270
        %v471 = vunpack.c.l.b16 %v271
        %v472 = vunpack.c.l.b16 %v272
        %v473 = vunpack.c.l.b16 %v273
        %v474 = vunpack.c.l.b16 %v274
        %v475 = vunpack.c.l.b16 %v275
        %v476 = vunpack.c.l.b16 %v276
        %v477 = vunpack.c.l.b16 %v277
        %v478 = vunpack.c.l.b16 %v278
        %v479 = vunpack.c.l.b16 %v279
        %v480 = vunpack.c.l.b16 %v280
        %v481 = vunpack.c.l.b16 %v281
        %v482 = vunpack.c.l.b16 %v282
        %v483 = vunpack.c.l.b16 %v283
        %v484 = vunpack.c.l.b16 %v284
        %v485 = vunpack.c.l.b16 %v285
        %v486 = vunpack.c.l.b16 %v286
        %v487 = vunpack.c.l.b16 %v287
        %v488 = vunpack.c.l.b16 %v288
        %v489 = vunpack.c.l.b16 %v289
        %v490 = vunpack.c.l.b16 %v290
        %v491 = vunpack.c.l.b16 %v291
        %v492 = vunpack.c.l.b16 %v292
        %v493 = vunpack.c.l.b16 %v293
        %v494 = vunpack.c.l.b16 %v294
        %v495 = vunpack.c.l.b16 %v295
        %v496 = vunpack.c.l.b16 %v296
        %v497 = vunpack.c.l.b16 %v297
        %v498 = vunpack.c.l.b16 %v298
        %v499 = vunpack.c.l.b16 %v299
        %v500 = vunpack.c.l.b16 %v300
        %v501 = vunpack.c.l.b16 %v301
        %v502 = vunpack.c.l.b16 %v302
        %v503 = vunpack.c.l.b16 %v303
        %v504 = vunpack.c.l.b16 %v304
        %v505 = vunpack.c.l.b16 %v305
        %v506 = vunpack.c.l.b16 %v306
        %v507 = vunpack.c.l.b16 %v307
        %v508 = vunpack.c.l.b16 %v308
        %v509 = vunpack.c.l.b16 %v309
        %v510 = vunpack.c.l.b16 %v310
        %v511 = vunpack.c.l.b16 %v311
        %v512 = vunpack.c.l.b16 %v312
        %v513 = vunpack.c.l.b16 %v313
        %v514 = vunpack.c.l.b16 %v314
        %v515 = vunpack.c.l.b16 %v315
        %v516 = vunpack.c.l.b16 %v316
        %v517 = vunpack.c.l.b16 %v317
        %v518 = vunpack.c.l.b16 %v318
        %v519 = vunpack.c.l.b16 %v319
        %v520 = vunpack.c.l.b16 %v320
        %v521 = vunpack.c.l.b16 %v321
        %v522 = vunpack.c.l.b16 %v322
        %v523 = vunpack.c.l.b16 %v323
        %v524 = vunpack.c.l.b16 %v324
        %v525 = vunpack.c.l.b16 %v325
        %v526 = vunpack.c.l.b16 %v326
        %v527 = vunpack.c.l.b16 %v327
        %v528 = vunpack.c.l.b16 %v328
        %v529 = vunpack.c.l.b16 %v329
        %v530 = vunpack.c.l.b16 %v330
        %v531 = vunpack.c.l.b16 %v331
        %v532 = vunpack.c.l.b16 %v332
        %v533 = vpack.c.b16 %v436, %v435
        %v534 = vpack.c.b16 %v438, %v437
        %v535 = vpack.c.b16 %v440, %v439
        %v536 = vpack.c.b16 %v442, %v441
        %v537 = vpack.c.b16 %v444, %v443
        %v538 = vpack.c.b16 %v446, %v445
        %v539 = vpack.c.b16 %v448, %v447
        %v540 = vpack.c.b16 %v450, %v449
        %v541 = vpack.c.b16 %v452, %v451
        %v542 = vpack.c.b16 %v454, %v453
        %v543 = vpack.c.b16 %v456, %v455
        %v544 = vpack.c.b16 %v458, %v457
        %v545 = vpack.c.b16 %v460, %v459
        %v546 = vpack.c.b16 %v462, %v461
        %v547 = vpack.c.b16 %v464, %v463
        %v548 = vpack.c.b16 %v466, %v465
        %v549 = vpack.c.b16 %v468, %v467
        %v550 = vpack.c.b16 %v470, %v469
        %v551 = vpack.c.b16 %v472, %v471
        %v552 = vpack.c.b16 %v474, %v473
        %v553 = vpack.c.b16 %v476, %v475
        %v554 = vpack.c.b16 %v478, %v477
        %v555 = vpack.c.b16 %v480, %v479
        %v556 = vpack.c.b16 %v482, %v481
        %v557 = vpack.c.b16 %v484, %v483
        %v558 = vpack.c.b16 %v486, %v485
        %v559 = vpack.c.b16 %v488, %v487
        %v560 = vpack.c.b16 %v490, %v489
        %v561 = vpack.c.b16 %v492, %v491
        %v562 = vpack.c.b16 %v494, %v493
        %v563 = vpack.c.b16 %v496, %v495
        %v564 = vpack.c.b16 %v498, %v497
        %v565 = vpack.c.b16 %v500, %v499
        %v566 = vpack.c.b16 %v502, %v501
        %v567 = vpack.c.b16 %v504, %v503
        %v568 = vpack.c.b16 %v506, %v505
        %v569 = vpack.c.b16 %v508, %v507
        %v570 = vpack.c.b16 %v510, %v509
        %v571 = vpack.c.b16 %v512, %v511
        %v572 = vpack.c.b16 %v514, %v513
        %v573 = vpack.c.b16 %v516, %v515
        %v574 = vpack.c.b16 %v518, %v517
        %v575 = vpack.c.b16 %v520, %v519
        %v576 = vpack.c.b16 %v522, %v521
        %v577 = vpack.c.b16 %v524, %v523
        %v578 = vpack.c.b16 %v526, %v525
        %v579 = vpack.c.b16 %v528, %v527
        %v580 = vpack.c.b16 %v530, %v529
        %v581 = vpack.c.b16 %v532, %v531
        %vm631 = vcmask 130048
        %v633 = vsel %vm631, %v227, 0
        %v636 = vsel %vm631, %v234, 0
        %638 = vmatpush.bf16.msra.mxu0 %v540
        %639 = vmatpush.bf16.msra.mxu0 %v539
        %640 = vmatpush.bf16.msra.mxu0 %v538
        %641 = vmatpush.bf16.msra.mxu0 %v537
        %642 = vmatpush.bf16.msra.mxu0 %v536
        %643 = vmatpush.bf16.msra.mxu0 %v535
        %644 = vmatpush.bf16.msra.mxu0 %v534
        %645 = vmatpush.bf16.msra.mxu0 %v533
        %646 = vmatmul.bf16.gmra.mxu0 %v221
        %v647 = vpop.f32.mrf.mxu0
        %v648 = vadd.f32 %v335, %v647
        %v649 = vpop.f32.mrf.mxu0
        %v650 = vadd.f32 %v335, %v649
        %651 = vmatmul.bf16.gmra.mxu0 %v228
        %v652 = vpop.f32.mrf.mxu0
        %v653 = vadd.f32 %v335, %v652
        %v654 = vpop.f32.mrf.mxu0
        %v655 = vadd.f32 %v335, %v654
        %656 = vdwg.mxu0
        %657 = vmatpush.bf16.msra.mxu0 %v548
        %658 = vmatpush.bf16.msra.mxu0 %v547
        %659 = vmatpush.bf16.msra.mxu0 %v546
        %660 = vmatpush.bf16.msra.mxu0 %v545
        %661 = vmatpush.bf16.msra.mxu0 %v544
        %662 = vmatpush.bf16.msra.mxu0 %v543
        %663 = vmatpush.bf16.msra.mxu0 %v542
        %664 = vmatpush.bf16.msra.mxu0 %v541
        %665 = vmatmul.bf16.gmra.mxu0 %v222
        %v666 = vpop.f32.mrf.mxu0
        %v667 = vadd.f32 %v648, %v666
        %v668 = vpop.f32.mrf.mxu0
        %v669 = vadd.f32 %v650, %v668
        %670 = vmatmul.bf16.gmra.mxu0 %v229
        %v671 = vpop.f32.mrf.mxu0
        %v672 = vadd.f32 %v653, %v671
        %v673 = vpop.f32.mrf.mxu0
        %v674 = vadd.f32 %v655, %v673
        %675 = vdwg.mxu0
        %676 = vmatpush.bf16.msra.mxu0 %v556
        %677 = vmatpush.bf16.msra.mxu0 %v555
        %678 = vmatpush.bf16.msra.mxu0 %v554
        %679 = vmatpush.bf16.msra.mxu0 %v553
        %680 = vmatpush.bf16.msra.mxu0 %v552
        %681 = vmatpush.bf16.msra.mxu0 %v551
        %682 = vmatpush.bf16.msra.mxu0 %v550
        %683 = vmatpush.bf16.msra.mxu0 %v549
        %684 = vmatmul.bf16.gmra.mxu0 %v223
        %v685 = vpop.f32.mrf.mxu0
        %v686 = vadd.f32 %v667, %v685
        %v687 = vpop.f32.mrf.mxu0
        %v688 = vadd.f32 %v669, %v687
        %689 = vmatmul.bf16.gmra.mxu0 %v230
        %v690 = vpop.f32.mrf.mxu0
        %v691 = vadd.f32 %v672, %v690
        %v692 = vpop.f32.mrf.mxu0
        %v693 = vadd.f32 %v674, %v692
        %694 = vdwg.mxu0
        %695 = vmatpush.bf16.msra.mxu0 %v564
        %696 = vmatpush.bf16.msra.mxu0 %v563
        %697 = vmatpush.bf16.msra.mxu0 %v562
        %698 = vmatpush.bf16.msra.mxu0 %v561
        %699 = vmatpush.bf16.msra.mxu0 %v560
        %700 = vmatpush.bf16.msra.mxu0 %v559
        %701 = vmatpush.bf16.msra.mxu0 %v558
        %702 = vmatpush.bf16.msra.mxu0 %v557
        %703 = vmatmul.bf16.gmra.mxu0 %v224
        %v704 = vpop.f32.mrf.mxu0
        %v705 = vadd.f32 %v686, %v704
        %v706 = vpop.f32.mrf.mxu0
        %v707 = vadd.f32 %v688, %v706
        %708 = vmatmul.bf16.gmra.mxu0 %v231
        %v709 = vpop.f32.mrf.mxu0
        %v710 = vadd.f32 %v691, %v709
        %v711 = vpop.f32.mrf.mxu0
        %v712 = vadd.f32 %v693, %v711
        %713 = vdwg.mxu0
        %714 = vmatpush.bf16.msra.mxu0 %v572
        %715 = vmatpush.bf16.msra.mxu0 %v571
        %716 = vmatpush.bf16.msra.mxu0 %v570
        %717 = vmatpush.bf16.msra.mxu0 %v569
        %718 = vmatpush.bf16.msra.mxu0 %v568
        %719 = vmatpush.bf16.msra.mxu0 %v567
        %720 = vmatpush.bf16.msra.mxu0 %v566
        %721 = vmatpush.bf16.msra.mxu0 %v565
        %722 = vmatmul.bf16.gmra.mxu0 %v225
        %v723 = vpop.f32.mrf.mxu0
        %v724 = vadd.f32 %v705, %v723
        %v725 = vpop.f32.mrf.mxu0
        %v726 = vadd.f32 %v707, %v725
        %727 = vmatmul.bf16.gmra.mxu0 %v232
        %v728 = vpop.f32.mrf.mxu0
        %v729 = vadd.f32 %v710, %v728
        %v730 = vpop.f32.mrf.mxu0
        %v731 = vadd.f32 %v712, %v730
        %732 = vdwg.mxu0
        %733 = vmatpush.bf16.msra.mxu0 %v580
        %734 = vmatpush.bf16.msra.mxu0 %v579
        %735 = vmatpush.bf16.msra.mxu0 %v578
        %736 = vmatpush.bf16.msra.mxu0 %v577
        %737 = vmatpush.bf16.msra.mxu0 %v576
        %738 = vmatpush.bf16.msra.mxu0 %v575
        %739 = vmatpush.bf16.msra.mxu0 %v574
        %740 = vmatpush.bf16.msra.mxu0 %v573
        %741 = vmatmul.bf16.gmra.mxu0 %v226
        %v742 = vpop.f32.mrf.mxu0
        %v743 = vadd.f32 %v724, %v742
        %v744 = vpop.f32.mrf.mxu0
        %v745 = vadd.f32 %v726, %v744
        %746 = vmatmul.bf16.gmra.mxu0 %v233
        %v747 = vpop.f32.mrf.mxu0
        %v748 = vadd.f32 %v729, %v747
        %v749 = vpop.f32.mrf.mxu0
        %v750 = vadd.f32 %v731, %v749
        %751 = vdwg.mxu0
        %752 = vmatpush.bf16.msra.mxu0 0
        %753 = vmatpush.bf16.msra.mxu0 0
        %754 = vmatpush.bf16.msra.mxu0 0
        %755 = vmatpush.bf16.msra.mxu0 0
        %756 = vmatpush.bf16.msra.mxu0 0
        %757 = vmatpush.bf16.msra.mxu0 0
        %758 = vmatpush.bf16.msra.mxu0 0
        %759 = vmatpush.bf16.msra.mxu0 %v581
        %760 = vmatmul.bf16.gmra.mxu0 %v633
        %v761 = vpop.f32.mrf.mxu0
        %v762 = vadd.f32 %v743, %v761
        %v763 = vpop.f32.mrf.mxu0
        %v764 = vadd.f32 %v745, %v763
        %765 = vmatmul.bf16.gmra.mxu0 %v636
        %v766 = vpop.f32.mrf.mxu0
        %v767 = vadd.f32 %v748, %v766
        %v768 = vpop.f32.mrf.mxu0
        %v769 = vadd.f32 %v750, %v768
        %770 = vdwg.mxu0
        %vm771 = vcmask 80896
        %772 = vst.msk [vmem:[%s190] sm:$0xff] %vm771, %v762
        %773 = vst.msk [vmem:[%s190 + $0x8] sm:$0xff] %vm771, %v764
        %774 = vst.msk [vmem:[%s190 + $0x10] sm:$0xff] %vm771, %v767
        %775 = vst.msk [vmem:[%s190 + $0x18] sm:$0xff] %vm771, %v769
        %s776 = smul.u32 4, %s15
        %p777 = scmp.lt.s32.totalorder %s776, 7
        %s778 = scalar_select %p777, %s776, 7
        %s779 = smul.addr %s778, 8
        %s780 = scalar_lea.vmem %s3, %s779
        // Predicated region
        $region37: #{tpu_custom_call.1} parent=31 // pred_check
          %p781 = pneg %p101
        $region38: #{tpu_custom_call.1} parent=31 // pred_check_branch
          %783 = sbr.rel (%p781) target = $region40
        $region39: #{tpu_custom_call.1} parent=31 // pred_region
          %s784 = smul.u32 4, %s15
        $region40: #{tpu_custom_call.1} parent=31 // pred_fallthru
          _
      $region32: #{tpu_custom_call.1} parent=5 // pred_fallthru
        _
      %p785 = scmp.le.s32.totalorder 2, %s10
      // Predicated region
      $region41: #{tpu_custom_call.1} parent=5 // pred_check
        %p786 = pneg %p785
      $region42: #{tpu_custom_call.1} parent=5 // pred_check_branch
        %788 = sbr.rel (%p786) target = $region44
      $region43: #{tpu_custom_call.1} parent=5 // pred_region
        %s789 = ssub.s32 %s10, 2
        // Predicated region
        $region45: #{tpu_custom_call.1} parent=43 // pred_check
          %p790 = pneg %p107
        $region46: #{tpu_custom_call.1} parent=43 // pred_check_branch
          %792 = sbr.rel (%p790) target = $region48
        $region47: #{tpu_custom_call.1} parent=43 // pred_region
          %s793 = smul.u32 4, %s16
          %p794 = scmp.lt.s32.totalorder %s793, 7
          %s795 = scalar_select %p794, %s793, 7
          %s796 = smul.addr %s795, 8
          %s797 = scalar_lea.vmem %s3, %s796
        $region48: #{tpu_custom_call.1} parent=43 // pred_fallthru
          _
      $region44: #{tpu_custom_call.1} parent=5 // pred_fallthru
        _
    $region6: #{tpu_custom_call.1} parent=1 // loop_footer
      %s14 = sadd.s32 1, %s10
    $region7: #{tpu_custom_call.1} parent=1 // loop_footer_branch
      %9 = sbr.rel target = $region3
    $region8: #{tpu_custom_call.1} parent=1 // loop_exit
      _
    %798 = vsyncpa [#allocation3], 1
    %s799 = scalar_lea.sflag [#allocation3], 1
    %800 = vsyncpa %s799, 1

</llo_original>
